<compile_context>
chip_gen: v5e
topology: v5e:2x2
jax: 0.10.0
libtpu: 0.0.40
codegen_flags: <defaults>
</compile_context>

<pallas_src>
import math

import jax
import jax.numpy as jnp
from jax.experimental import pallas as pl
from jax.experimental.pallas import tpu as pltpu


# ---------------------------------------------------------------------------
# Fused Pallas kernel (all TemporalBlocks + final projection)
# ---------------------------------------------------------------------------

def _make_tcn_kernel(layer_meta, T, out_size):
    """layer_meta: tuple of dicts {'dilation': int, 'has_ds': bool} per block."""

    def kernel(*refs):
        it = iter(refs)
        x_ref = next(it)
        layers = []
        for m in layer_meta:
            w1, b1, w2, b2 = next(it), next(it), next(it), next(it)
            wd = next(it) if m["has_ds"] else None
            bd = next(it) if m["has_ds"] else None
            layers.append((m, w1, b1, w2, b2, wd, bd))
        pw_ref, pb_ref, o_ref = next(it), next(it), next(it)

        def causal_conv(v, d, w_ref, b_ref):
            # v: (T, Cin) f32;  w_ref: (2*Cin, Cout) bf16 = [W_prev ; W_cur]
            cin = v.shape[-1]
            w = w_ref[...]
            if d < T:
                # time-shifted copy: vprev[t] = v[t - d], zeros for t < d
                vprev = jnp.concatenate(
                    [jnp.zeros((d, cin), jnp.float32), v[: T - d, :]], axis=0)
                stacked = jnp.concatenate([vprev, v], axis=-1)        # (T, 2*Cin)
                out = jnp.dot(stacked.astype(jnp.bfloat16), w,
                              preferred_element_type=jnp.float32)
            else:
                # prev tap only reads left padding -> skip that half entirely
                out = jnp.dot(v.astype(jnp.bfloat16), w[cin:, :],
                              preferred_element_type=jnp.float32)
            return out + b_ref[...]                                    # (T, Cout)

        h = x_ref[0]                                                   # (T, Cin) f32
        for m, w1, b1, w2, b2, wd, bd in layers:
            d = m["dilation"]
            h1 = jnp.maximum(causal_conv(h, d, w1, b1), 0.0)           # conv1+chomp+relu
            h2 = jnp.maximum(causal_conv(h1, d, w2, b2), 0.0)          # conv2+chomp+relu
            if m["has_ds"]:
                res = jnp.dot(h.astype(jnp.bfloat16), wd[...],
                              preferred_element_type=jnp.float32) + bd[...]
            else:
                res = h
            h = jnp.maximum(h2 + res, 0.0)                             # relu(out + res)

        # Final projection on the last timestep only (== network(x)[:, :, -1:]).
        last = h[T - 1:, :].astype(jnp.bfloat16)                       # (1, hidden)
        proj = jnp.dot(last, pw_ref[...],
                       preferred_element_type=jnp.float32) + pb_ref[...]
        o_ref[...] = proj[None]                                        # (1, 1, out)

    return kernel


def tcn_forward(x, params):
    """x: (B, T, input_size) -> (B, 1, out_size) via a single fused pallas_call."""
    B, T, Cin = x.shape
    out_size = params["proj_w"].shape[1]

    def full_spec(arr):
        # whole (tiny) weight in VMEM, same block for every grid step -> DMA'd once
        return pl.BlockSpec(arr.shape, lambda b, _nd=arr.ndim: (0,) * _nd)

    layer_meta = []
    inputs = [x.astype(jnp.float32)]
    in_specs = [pl.BlockSpec((1, T, Cin), lambda b: (b, 0, 0))]

    for i, blk in enumerate(params["blocks"]):
        meta = {"dilation": 2 ** i, "has_ds": "wd" in blk}
        layer_meta.append(meta)
        for name in ("w1", "b1", "w2", "b2"):
            inputs.append(blk[name])
            in_specs.append(full_spec(blk[name]))
        if meta["has_ds"]:
            for name in ("wd", "bd"):
                inputs.append(blk[name])
                in_specs.append(full_spec(blk[name]))

    for name in ("proj_w", "proj_b"):
        inputs.append(params[name])
        in_specs.append(full_spec(params[name]))

    return pl.pallas_call(
        _make_tcn_kernel(tuple(layer_meta), T, out_size),
        grid=(B,),
        out_shape=jax.ShapeDtypeStruct((B, 1, out_size), jnp.float32),
        in_specs=in_specs,
        out_specs=pl.BlockSpec((1, 1, out_size), lambda b: (b, 0, 0)),
        compiler_params=pltpu.CompilerParams(
            dimension_semantics=("parallel",)),      # batch across TCs on v7x
    )(*inputs)


# ---------------------------------------------------------------------------
# Parameter init (deterministic, synthetic — mirrors the module's shapes).
# Weight layout prep (tap stacking, transpose, bf16 cast) is done ONCE here.
# ---------------------------------------------------------------------------

def _init_conv(key, cin, cout, ksz):
    kw, kb = jax.random.split(key)
    v = 0.01 * jax.random.normal(kw, (cout, cin, ksz), jnp.float32)
    # weight_norm: w = g * v / ||v||_(per out-channel); g initialized to ||v|| => w == v
    norm = jnp.sqrt(jnp.sum(v * v, axis=(1, 2), keepdims=True))
    w = norm * v / jnp.maximum(norm, 1e-12)
    bound = 1.0 / math.sqrt(cin * ksz)
    b = jax.random.uniform(kb, (cout,), jnp.float32, -bound, bound)
    return w, b                     # w: (Cout, Cin, K)  -- PyTorch Conv1d layout


def _stack_taps(w):
    # (Cout, Cin, 2) -> (2*Cin, Cout); rows [0:Cin] act on x[t-d], rows [Cin:] on x[t]
    return jnp.concatenate([w[:, :, 0].T, w[:, :, 1].T], axis=0).astype(jnp.bfloat16)


def init_tcn_params(key, input_size, hidden, n_layers, out_size):
    params = {"blocks": []}
    keys = jax.random.split(key, n_layers + 1)
    for i in range(n_layers):
        cin = input_size if i == 0 else hidden
        cout = hidden
        k1, k2, k3 = jax.random.split(keys[i], 3)
        w1, b1 = _init_conv(k1, cin, cout, 2)
        w2, b2 = _init_conv(k2, cout, cout, 2)
        blk = {
            "w1": _stack_taps(w1), "b1": b1.reshape(1, cout),
            "w2": _stack_taps(w2), "b2": b2.reshape(1, cout),
        }
        if cin != cout:                      # 1x1 downsample conv
            kdw, kdb = jax.random.split(k3)
            wd = 0.01 * jax.random.normal(kdw, (cout, cin, 1), jnp.float32)
            bound = 1.0 / math.sqrt(cin)
            bd = jax.random.uniform(kdb, (cout,), jnp.float32, -bound, bound)
            blk["wd"] = wd[:, :, 0].T.astype(jnp.bfloat16)
            blk["bd"] = bd.reshape(1, cout)
        params["blocks"].append(blk)

    kw, kb = jax.random.split(keys[-1])
    bound = 1.0 / math.sqrt(hidden)
    params["proj_w"] = jax.random.uniform(
        kw, (hidden, out_size), jnp.float32, -bound, bound).astype(jnp.bfloat16)
    params["proj_b"] = jax.random.uniform(kb, (1, out_size), jnp.float32, -bound, bound)
    return params


# ---------------------------------------------------------------------------
# Pure-JAX reference (same math, no Pallas) to validate the fused kernel.
# ---------------------------------------------------------------------------

def _reference_forward(x, params):
    h = x.astype(jnp.float32)
    B, T, _ = h.shape
    for i, blk in enumerate(params["blocks"]):
        d = 2 ** i

        def conv(v, w, b):
            cin = v.shape[-1]
            if d < T:
                vprev = jnp.concatenate(
                    [jnp.zeros((B, d, cin), jnp.float32), v[:, : T - d, :]], axis=1)
                stacked = jnp.concatenate([vprev, v], axis=-1)
                out = jnp.einsum("btk,ko->bto", stacked.astype(jnp.bfloat16), w,
                                 preferred_element_type=jnp.float32)
            else:
                out = jnp.einsum("btk,ko->bto", v.astype(jnp.bfloat16), w[cin:, :],
                                 preferred_element_type=jnp.float32)
            return out + b[None]

        h1 = jax.nn.relu(conv(h, blk["w1"], blk["b1"]))
        h2 = jax.nn.relu(conv(h1, blk["w2"], blk["b2"]))
        if "wd" in blk:
            res = jnp.einsum("btk,ko->bto", h.astype(jnp.bfloat16), blk["wd"],
                             preferred_element_type=jnp.float32) + blk["bd"][None]
        else:
            res = h
        h = jax.nn.relu(h2 + res)
    last = h[:, -1, :].astype(jnp.bfloat16)
    out = jnp.dot(last, params["proj_w"],
                  preferred_element_type=jnp.float32) + params["proj_b"]
    return out[:, None, :]


if __name__ == "__main__":
    # Small, module-consistent shapes:
    B, T = 2, 16          # batch, seq_len
    input_size = 4
    tcn_hidden_size = 32
    tcn_n_layers = 2      # dilations 1, 2
    out_size = 8

    key = jax.random.PRNGKey(0)
    k_params, k_x = jax.random.split(key)
    params = init_tcn_params(k_params, input_size, tcn_hidden_size,
                             tcn_n_layers, out_size)
    x = jax.random.normal(k_x, (B, T, input_size), jnp.float32)

    out = jax.block_until_ready(tcn_forward(x, params))
    ref = jax.block_until_ready(_reference_forward(x, params))

    assert out.shape == (B, 1, out_size), out.shape
    err = float(jnp.max(jnp.abs(out - ref)))
    assert err < 1e-4, f"max abs err {err}"

    print("KERNEL_OK")
</pallas_src>

<mosaic_0001>
module attributes {stable_mosaic.version = 11 : i64} {
  func.func @kernel(%arg0: i32, %arg1: memref<1x16x4xf32, #tpu.memory_space<vmem>>, %arg2: memref<8x32xbf16, #tpu.memory_space<vmem>>, %arg3: memref<1x32xf32, #tpu.memory_space<vmem>>, %arg4: memref<64x32xbf16, #tpu.memory_space<vmem>>, %arg5: memref<1x32xf32, #tpu.memory_space<vmem>>, %arg6: memref<4x32xbf16, #tpu.memory_space<vmem>>, %arg7: memref<1x32xf32, #tpu.memory_space<vmem>>, %arg8: memref<64x32xbf16, #tpu.memory_space<vmem>>, %arg9: memref<1x32xf32, #tpu.memory_space<vmem>>, %arg10: memref<64x32xbf16, #tpu.memory_space<vmem>>, %arg11: memref<1x32xf32, #tpu.memory_space<vmem>>, %arg12: memref<32x8xbf16, #tpu.memory_space<vmem>>, %arg13: memref<1x8xf32, #tpu.memory_space<vmem>>, %arg14: memref<1x1x8xf32, #tpu.memory_space<vmem>>) attributes {dimension_semantics = [#tpu.dimension_semantics<parallel>], iteration_bounds = array<i64: 2>, scalar_prefetch = 0 : i64, scratch_operands = 0 : i64, tpu.core_type = #tpu.core_type<tc>, window_params = [{transform_indices = @transform_0, window_bounds = array<i64: 1, 16, 4>}, {pipeline_mode = #tpu.pipeline_mode<synchronous>, transform_indices = @transform_1, window_bounds = array<i64: 8, 32>}, {pipeline_mode = #tpu.pipeline_mode<synchronous>, transform_indices = @transform_2, window_bounds = array<i64: 1, 32>}, {pipeline_mode = #tpu.pipeline_mode<synchronous>, transform_indices = @transform_3, window_bounds = array<i64: 64, 32>}, {pipeline_mode = #tpu.pipeline_mode<synchronous>, transform_indices = @transform_4, window_bounds = array<i64: 1, 32>}, {pipeline_mode = #tpu.pipeline_mode<synchronous>, transform_indices = @transform_5, window_bounds = array<i64: 4, 32>}, {pipeline_mode = #tpu.pipeline_mode<synchronous>, transform_indices = @transform_6, window_bounds = array<i64: 1, 32>}, {pipeline_mode = #tpu.pipeline_mode<synchronous>, transform_indices = @transform_7, window_bounds = array<i64: 64, 32>}, {pipeline_mode = #tpu.pipeline_mode<synchronous>, transform_indices = @transform_8, window_bounds = array<i64: 1, 32>}, {pipeline_mode = #tpu.pipeline_mode<synchronous>, transform_indices = @transform_9, window_bounds = array<i64: 64, 32>}, {pipeline_mode = #tpu.pipeline_mode<synchronous>, transform_indices = @transform_10, window_bounds = array<i64: 1, 32>}, {pipeline_mode = #tpu.pipeline_mode<synchronous>, transform_indices = @transform_11, window_bounds = array<i64: 32, 8>}, {pipeline_mode = #tpu.pipeline_mode<synchronous>, transform_indices = @transform_12, window_bounds = array<i64: 1, 8>}, {transform_indices = @transform_13, window_bounds = array<i64: 1, 1, 8>}]} {
    %c0 = arith.constant 0 : index
    %c0_0 = arith.constant 0 : index
    %c0_1 = arith.constant 0 : index
    %0 = vector.load %arg1[%c0, %c0_0, %c0_1] : memref<1x16x4xf32, #tpu.memory_space<vmem>>, vector<1x16x4xf32>
    %1 = vector.shape_cast %0 : vector<1x16x4xf32> to vector<16x4xf32>
    %c0_2 = arith.constant 0 : index
    %c0_3 = arith.constant 0 : index
    %2 = vector.load %arg2[%c0_2, %c0_3] : memref<8x32xbf16, #tpu.memory_space<vmem>>, vector<8x32xbf16>
    %cst = arith.constant 0.000000e+00 : f32
    %3 = vector.broadcast %cst : f32 to vector<1x4xf32>
    %4 = vector.extract_strided_slice %1 {offsets = [0, 0], sizes = [15, 4], strides = [1, 1]} : vector<16x4xf32> to vector<15x4xf32>
    %5 = tpu.concatenate %3, %4 in 0 : vector<1x4xf32>, vector<15x4xf32> -> vector<16x4xf32>
    %6 = tpu.concatenate %5, %1 in 1 : vector<16x4xf32>, vector<16x4xf32> -> vector<16x8xf32>
    %7 = arith.truncf %6 : vector<16x8xf32> to vector<16x8xbf16>
    %cst_4 = arith.constant dense<0.000000e+00> : vector<16x32xf32>
    %8 = tpu.matmul %7, %2, %cst_4 {dimension_numbers = #tpu.dot_dimension_numbers<[1], [0], [0], [1], [0, 0, 1, 1], [], []>} : vector<16x8xbf16>, vector<8x32xbf16>, vector<16x32xf32> -> vector<16x32xf32>
    %c0_5 = arith.constant 0 : index
    %c0_6 = arith.constant 0 : index
    %9 = vector.load %arg3[%c0_5, %c0_6] : memref<1x32xf32, #tpu.memory_space<vmem>>, vector<1x32xf32>
    %10 = vector.broadcast %9 : vector<1x32xf32> to vector<16x32xf32>
    %11 = arith.addf %8, %10 : vector<16x32xf32>
    %cst_7 = arith.constant 0.000000e+00 : f32
    %12 = vector.broadcast %cst_7 : f32 to vector<16x32xf32>
    %13 = arith.maximumf %11, %12 : vector<16x32xf32>
    %c0_8 = arith.constant 0 : index
    %c0_9 = arith.constant 0 : index
    %14 = vector.load %arg4[%c0_8, %c0_9] : memref<64x32xbf16, #tpu.memory_space<vmem>>, vector<64x32xbf16>
    %cst_10 = arith.constant 0.000000e+00 : f32
    %15 = vector.broadcast %cst_10 : f32 to vector<1x32xf32>
    %16 = vector.extract_strided_slice %13 {offsets = [0, 0], sizes = [15, 32], strides = [1, 1]} : vector<16x32xf32> to vector<15x32xf32>
    %17 = tpu.concatenate %15, %16 in 0 : vector<1x32xf32>, vector<15x32xf32> -> vector<16x32xf32>
    %18 = tpu.concatenate %17, %13 in 1 : vector<16x32xf32>, vector<16x32xf32> -> vector<16x64xf32>
    %19 = arith.truncf %18 : vector<16x64xf32> to vector<16x64xbf16>
    %cst_11 = arith.constant dense<0.000000e+00> : vector<16x32xf32>
    %20 = tpu.matmul %19, %14, %cst_11 {dimension_numbers = #tpu.dot_dimension_numbers<[1], [0], [0], [1], [0, 0, 1, 1], [], []>} : vector<16x64xbf16>, vector<64x32xbf16>, vector<16x32xf32> -> vector<16x32xf32>
    %c0_12 = arith.constant 0 : index
    %c0_13 = arith.constant 0 : index
    %21 = vector.load %arg5[%c0_12, %c0_13] : memref<1x32xf32, #tpu.memory_space<vmem>>, vector<1x32xf32>
    %22 = vector.broadcast %21 : vector<1x32xf32> to vector<16x32xf32>
    %23 = arith.addf %20, %22 : vector<16x32xf32>
    %cst_14 = arith.constant 0.000000e+00 : f32
    %24 = vector.broadcast %cst_14 : f32 to vector<16x32xf32>
    %25 = arith.maximumf %23, %24 : vector<16x32xf32>
    %26 = arith.truncf %1 : vector<16x4xf32> to vector<16x4xbf16>
    %c0_15 = arith.constant 0 : index
    %c0_16 = arith.constant 0 : index
    %27 = vector.load %arg6[%c0_15, %c0_16] : memref<4x32xbf16, #tpu.memory_space<vmem>>, vector<4x32xbf16>
    %cst_17 = arith.constant dense<0.000000e+00> : vector<16x32xf32>
    %28 = tpu.matmul %26, %27, %cst_17 {dimension_numbers = #tpu.dot_dimension_numbers<[1], [0], [0], [1], [0, 0, 1, 1], [], []>} : vector<16x4xbf16>, vector<4x32xbf16>, vector<16x32xf32> -> vector<16x32xf32>
    %c0_18 = arith.constant 0 : index
    %c0_19 = arith.constant 0 : index
    %29 = vector.load %arg7[%c0_18, %c0_19] : memref<1x32xf32, #tpu.memory_space<vmem>>, vector<1x32xf32>
    %30 = vector.broadcast %29 : vector<1x32xf32> to vector<16x32xf32>
    %31 = arith.addf %28, %30 : vector<16x32xf32>
    %32 = arith.addf %25, %31 : vector<16x32xf32>
    %cst_20 = arith.constant 0.000000e+00 : f32
    %33 = vector.broadcast %cst_20 : f32 to vector<16x32xf32>
    %34 = arith.maximumf %32, %33 : vector<16x32xf32>
    %c0_21 = arith.constant 0 : index
    %c0_22 = arith.constant 0 : index
    %35 = vector.load %arg8[%c0_21, %c0_22] : memref<64x32xbf16, #tpu.memory_space<vmem>>, vector<64x32xbf16>
    %cst_23 = arith.constant 0.000000e+00 : f32
    %36 = vector.broadcast %cst_23 : f32 to vector<2x32xf32>
    %37 = vector.extract_strided_slice %34 {offsets = [0, 0], sizes = [14, 32], strides = [1, 1]} : vector<16x32xf32> to vector<14x32xf32>
    %38 = tpu.concatenate %36, %37 in 0 : vector<2x32xf32>, vector<14x32xf32> -> vector<16x32xf32>
    %39 = tpu.concatenate %38, %34 in 1 : vector<16x32xf32>, vector<16x32xf32> -> vector<16x64xf32>
    %40 = arith.truncf %39 : vector<16x64xf32> to vector<16x64xbf16>
    %cst_24 = arith.constant dense<0.000000e+00> : vector<16x32xf32>
    %41 = tpu.matmul %40, %35, %cst_24 {dimension_numbers = #tpu.dot_dimension_numbers<[1], [0], [0], [1], [0, 0, 1, 1], [], []>} : vector<16x64xbf16>, vector<64x32xbf16>, vector<16x32xf32> -> vector<16x32xf32>
    %c0_25 = arith.constant 0 : index
    %c0_26 = arith.constant 0 : index
    %42 = vector.load %arg9[%c0_25, %c0_26] : memref<1x32xf32, #tpu.memory_space<vmem>>, vector<1x32xf32>
    %43 = vector.broadcast %42 : vector<1x32xf32> to vector<16x32xf32>
    %44 = arith.addf %41, %43 : vector<16x32xf32>
    %cst_27 = arith.constant 0.000000e+00 : f32
    %45 = vector.broadcast %cst_27 : f32 to vector<16x32xf32>
    %46 = arith.maximumf %44, %45 : vector<16x32xf32>
    %c0_28 = arith.constant 0 : index
    %c0_29 = arith.constant 0 : index
    %47 = vector.load %arg10[%c0_28, %c0_29] : memref<64x32xbf16, #tpu.memory_space<vmem>>, vector<64x32xbf16>
    %cst_30 = arith.constant 0.000000e+00 : f32
    %48 = vector.broadcast %cst_30 : f32 to vector<2x32xf32>
    %49 = vector.extract_strided_slice %46 {offsets = [0, 0], sizes = [14, 32], strides = [1, 1]} : vector<16x32xf32> to vector<14x32xf32>
    %50 = tpu.concatenate %48, %49 in 0 : vector<2x32xf32>, vector<14x32xf32> -> vector<16x32xf32>
    %51 = tpu.concatenate %50, %46 in 1 : vector<16x32xf32>, vector<16x32xf32> -> vector<16x64xf32>
    %52 = arith.truncf %51 : vector<16x64xf32> to vector<16x64xbf16>
    %cst_31 = arith.constant dense<0.000000e+00> : vector<16x32xf32>
    %53 = tpu.matmul %52, %47, %cst_31 {dimension_numbers = #tpu.dot_dimension_numbers<[1], [0], [0], [1], [0, 0, 1, 1], [], []>} : vector<16x64xbf16>, vector<64x32xbf16>, vector<16x32xf32> -> vector<16x32xf32>
    %c0_32 = arith.constant 0 : index
    %c0_33 = arith.constant 0 : index
    %54 = vector.load %arg11[%c0_32, %c0_33] : memref<1x32xf32, #tpu.memory_space<vmem>>, vector<1x32xf32>
    %55 = vector.broadcast %54 : vector<1x32xf32> to vector<16x32xf32>
    %56 = arith.addf %53, %55 : vector<16x32xf32>
    %cst_34 = arith.constant 0.000000e+00 : f32
    %57 = vector.broadcast %cst_34 : f32 to vector<16x32xf32>
    %58 = arith.maximumf %56, %57 : vector<16x32xf32>
    %59 = arith.addf %58, %34 : vector<16x32xf32>
    %cst_35 = arith.constant 0.000000e+00 : f32
    %60 = vector.broadcast %cst_35 : f32 to vector<16x32xf32>
    %61 = arith.maximumf %59, %60 : vector<16x32xf32>
    %62 = vector.extract_strided_slice %61 {offsets = [15, 0], sizes = [1, 32], strides = [1, 1]} : vector<16x32xf32> to vector<1x32xf32>
    %63 = arith.truncf %62 : vector<1x32xf32> to vector<1x32xbf16>
    %c0_36 = arith.constant 0 : index
    %c0_37 = arith.constant 0 : index
    %64 = vector.load %arg12[%c0_36, %c0_37] : memref<32x8xbf16, #tpu.memory_space<vmem>>, vector<32x8xbf16>
    %cst_38 = arith.constant dense<0.000000e+00> : vector<1x8xf32>
    %65 = tpu.matmul %63, %64, %cst_38 {dimension_numbers = #tpu.dot_dimension_numbers<[1], [0], [0], [1], [0, 0, 1, 1], [], []>} : vector<1x32xbf16>, vector<32x8xbf16>, vector<1x8xf32> -> vector<1x8xf32>
    %c0_39 = arith.constant 0 : index
    %c0_40 = arith.constant 0 : index
    %66 = vector.load %arg13[%c0_39, %c0_40] : memref<1x8xf32, #tpu.memory_space<vmem>>, vector<1x8xf32>
    %67 = arith.addf %65, %66 : vector<1x8xf32>
    %68 = vector.shape_cast %67 : vector<1x8xf32> to vector<1x1x8xf32>
    %c0_41 = arith.constant 0 : index
    %c0_42 = arith.constant 0 : index
    %c0_43 = arith.constant 0 : index
    %69 = vector.load %arg14[%c0_41, %c0_42, %c0_43] : memref<1x1x8xf32, #tpu.memory_space<vmem>>, vector<1x1x8xf32>
    tpu.vector_store %arg14[%c0_41, %c0_42, %c0_43], %68 {strides = array<i32>} : memref<1x1x8xf32, #tpu.memory_space<vmem>>, vector<1x1x8xf32>,
    return
  }
  func.func @transform_0(%arg0: i32) -> (i32, i32, i32) {
    %c0_i32 = arith.constant 0 : i32
    %c0_i32_0 = arith.constant 0 : i32
    %c0_i32_1 = arith.constant 0 : i32
    return %arg0, %c0_i32, %c0_i32_0 : i32, i32, i32
  }
  func.func @transform_1(%arg0: i32) -> (i32, i32) {
    %c0_i32 = arith.constant 0 : i32
    %c0_i32_0 = arith.constant 0 : i32
    %c0_i32_1 = arith.constant 0 : i32
    return %c0_i32, %c0_i32_0 : i32, i32
  }
  func.func @transform_2(%arg0: i32) -> (i32, i32) {
    %c0_i32 = arith.constant 0 : i32
    %c0_i32_0 = arith.constant 0 : i32
    %c0_i32_1 = arith.constant 0 : i32
    return %c0_i32, %c0_i32_0 : i32, i32
  }
  func.func @transform_3(%arg0: i32) -> (i32, i32) {
    %c0_i32 = arith.constant 0 : i32
    %c0_i32_0 = arith.constant 0 : i32
    %c0_i32_1 = arith.constant 0 : i32
    return %c0_i32, %c0_i32_0 : i32, i32
  }
  func.func @transform_4(%arg0: i32) -> (i32, i32) {
    %c0_i32 = arith.constant 0 : i32
    %c0_i32_0 = arith.constant 0 : i32
    %c0_i32_1 = arith.constant 0 : i32
    return %c0_i32, %c0_i32_0 : i32, i32
  }
  func.func @transform_5(%arg0: i32) -> (i32, i32) {
    %c0_i32 = arith.constant 0 : i32
    %c0_i32_0 = arith.constant 0 : i32
    %c0_i32_1 = arith.constant 0 : i32
    return %c0_i32, %c0_i32_0 : i32, i32
  }
  func.func @transform_6(%arg0: i32) -> (i32, i32) {
    %c0_i32 = arith.constant 0 : i32
    %c0_i32_0 = arith.constant 0 : i32
    %c0_i32_1 = arith.constant 0 : i32
    return %c0_i32, %c0_i32_0 : i32, i32
  }
  func.func @transform_7(%arg0: i32) -> (i32, i32) {
    %c0_i32 = arith.constant 0 : i32
    %c0_i32_0 = arith.constant 0 : i32
    %c0_i32_1 = arith.constant 0 : i32
    return %c0_i32, %c0_i32_0 : i32, i32
  }
  func.func @transform_8(%arg0: i32) -> (i32, i32) {
    %c0_i32 = arith.constant 0 : i32
    %c0_i32_0 = arith.constant 0 : i32
    %c0_i32_1 = arith.constant 0 : i32
    return %c0_i32, %c0_i32_0 : i32, i32
  }
  func.func @transform_9(%arg0: i32) -> (i32, i32) {
    %c0_i32 = arith.constant 0 : i32
    %c0_i32_0 = arith.constant 0 : i32
    %c0_i32_1 = arith.constant 0 : i32
    return %c0_i32, %c0_i32_0 : i32, i32
  }
  func.func @transform_10(%arg0: i32) -> (i32, i32) {
    %c0_i32 = arith.constant 0 : i32
    %c0_i32_0 = arith.constant 0 : i32
    %c0_i32_1 = arith.constant 0 : i32
    return %c0_i32, %c0_i32_0 : i32, i32
  }
  func.func @transform_11(%arg0: i32) -> (i32, i32) {
    %c0_i32 = arith.constant 0 : i32
    %c0_i32_0 = arith.constant 0 : i32
    %c0_i32_1 = arith.constant 0 : i32
    return %c0_i32, %c0_i32_0 : i32, i32
  }
  func.func @transform_12(%arg0: i32) -> (i32, i32) {
    %c0_i32 = arith.constant 0 : i32
    %c0_i32_0 = arith.constant 0 : i32
    %c0_i32_1 = arith.constant 0 : i32
    return %c0_i32, %c0_i32_0 : i32, i32
  }
  func.func @transform_13(%arg0: i32) -> (i32, i32, i32) {
    %c0_i32 = arith.constant 0 : i32
    %c0_i32_0 = arith.constant 0 : i32
    %c0_i32_1 = arith.constant 0 : i32
    return %arg0, %c0_i32, %c0_i32_0 : i32, i32, i32
  }
}

</mosaic_0001>

<llo_original>
// kernel: tpu_custom_call.1
$region0: #{tpu_custom_call.1}
  #allocation0 [shape = 'u32[]', space=smem, size = 0x4, offset = 0x4, fixed_abs, tag = 'smem constant byte address 0x4 - core index']
  #allocation1 [shape = 'u32[72,128]{1,0:T(1,128)}', space=vmem, size = 0x9000, scoped, tag = 'internal scratch']
  %s0 = inlined_call_operand.vmem [shape: f32[2,16,4], index: 0, kind: input, shape index: {}]
  %s1 = inlined_call_operand.vmem [shape: bf16[8,32], index: 1, kind: input, shape index: {}]
  %s2 = inlined_call_operand.vmem [shape: f32[1,32], index: 2, kind: input, shape index: {}]
  %s3 = inlined_call_operand.vmem [shape: bf16[64,32], index: 3, kind: input, shape index: {}]
  %s4 = inlined_call_operand.vmem [shape: f32[1,32], index: 4, kind: input, shape index: {}]
  %s5 = inlined_call_operand.vmem [shape: bf16[4,32], index: 5, kind: input, shape index: {}]
  %s6 = inlined_call_operand.vmem [shape: f32[1,32], index: 6, kind: input, shape index: {}]
  %s7 = inlined_call_operand.vmem [shape: bf16[64,32], index: 7, kind: input, shape index: {}]
  %s8 = inlined_call_operand.vmem [shape: f32[1,32], index: 8, kind: input, shape index: {}]
  %s9 = inlined_call_operand.vmem [shape: bf16[64,32], index: 9, kind: input, shape index: {}]
  %s10 = inlined_call_operand.vmem [shape: f32[1,32], index: 10, kind: input, shape index: {}]
  %s11 = inlined_call_operand.vmem [shape: bf16[32,8], index: 11, kind: input, shape index: {}]
  %s12 = inlined_call_operand.vmem [shape: f32[1,8], index: 12, kind: input, shape index: {}]
  %s13 = inlined_call_operand.hbm [shape: f32[2,1,8], index: 13, kind: output, shape index: {}]
  %s14 = sld [smem:[#allocation0]]
  $region85: #{tpu_custom_call.1} parent=0
    _
  %s16 = ssub.s32 1, %s14
  %s17 = scalar_select 0, %s16, %s14
  $region1: #{tpu_custom_call.1} parent=0
    #allocation2 [shape = 'u8[1024]{0}', space=vmem, size = 0x400, scoped, tag = 'output window, operand 0']
    #allocation3 [shape = 's32[2]{0}', space=sflag, size = 0x8, scoped, tag = 'scoped memory for tpu_custom_call.1']
    %18 = vsyncpa [#allocation3], 0
    %s19 = scalar_lea.sflag [#allocation3], 1
    %20 = vsyncpa %s19, 0
    loop: start=0, step=1, limit=4
    $region2: #{tpu_custom_call.1} parent=1 // loop_pre_header
      _
    $region3: #{tpu_custom_call.1} parent=1 // loop_header
      %s22 = sphi 0, %s26
      %p23 = scmp.ge.s32.totalorder %s22, 4
      %s32 = sphi 0, %s34
      %s35 = sphi 0, %s32
      %s36 = sphi 0, %s35
      %s52 = sphi 0, %s36
      %s56 = sphi 0, %s56
      %s58 = sphi 0, %s56
      %s59 = sphi 0, %s58
      %s73 = sphi 0, %s59
      %s77 = sphi 0, %s77
      %s79 = sphi 0, %s77
      %s80 = sphi 0, %s79
      %s94 = sphi 0, %s80
      %s98 = sphi 0, %s98
      %s100 = sphi 0, %s98
      %s101 = sphi 0, %s100
      %s115 = sphi 0, %s101
      %s119 = sphi 0, %s119
      %s121 = sphi 0, %s119
      %s122 = sphi 0, %s121
      %s136 = sphi 0, %s122
      %s140 = sphi 0, %s140
      %s142 = sphi 0, %s140
      %s143 = sphi 0, %s142
      %s157 = sphi 0, %s143
      %s161 = sphi 0, %s161
      %s163 = sphi 0, %s161
      %s164 = sphi 0, %s163
      %s178 = sphi 0, %s164
      %s182 = sphi 0, %s182
      %s184 = sphi 0, %s182
      %s185 = sphi 0, %s184
      %s199 = sphi 0, %s185
      %s203 = sphi 0, %s203
      %s205 = sphi 0, %s203
      %s206 = sphi 0, %s205
      %s220 = sphi 0, %s206
      %s224 = sphi 0, %s224
      %s226 = sphi 0, %s224
      %s227 = sphi 0, %s226
      %s241 = sphi 0, %s227
      %s245 = sphi 0, %s245
      %s247 = sphi 0, %s245
      %s248 = sphi 0, %s247
      %s262 = sphi 0, %s248
      %s266 = sphi 0, %s266
      %s268 = sphi 0, %s266
      %s269 = sphi 0, %s268
      %s283 = sphi 0, %s269
      %s287 = sphi 0, %s287
      %s289 = sphi 0, %s287
      %s290 = sphi 0, %s289
      %s304 = sphi 0, %s290
      %s310 = sphi 0, %s312
      %s313 = sphi 0, %s310
      %s314 = sphi 0, %s313
      %s330 = sphi 0, %s314
    $region4: #{tpu_custom_call.1} parent=1 // loop_header_branch
      %25 = sbr.rel (%p23) target = $region8
    $region5: #{tpu_custom_call.1} parent=1 // loop_body
      %s27 = ssub.s32 %s22, 1
      %s28 = ssub.s32 %s22, 2
      %s29 = sadd.s32 %s22, 1
      %s30 = ssub.s32 %s22, %s29
      %p31 = scmp.eq.s32.totalorder %s30, 0
      %s33 = sadd.s32 %s32, 1
      %s34 = scalar_select %p31, %s32, %s33
      %p37 = pneg %p31
      %p38 = scmp.eq.s32.totalorder %s22, 1
      %p39 = por %p37, %p38
      %p40 = scmp.ne.s32.totalorder %s32, %s35
      %p41 = scmp.eq.s32.totalorder %s22, 0
      %p42 = por %p40, %p41
      %p43 = scmp.ne.s32.totalorder %s32, %s35
      %p44 = scmp.eq.s32.totalorder %s27, 1
      %p45 = por %p43, %p44
      %p46 = scmp.ne.s32.totalorder %s35, %s36
      %p47 = scmp.eq.s32.totalorder %s27, 0
      %p48 = por %p46, %p47
      %p49 = scmp.ne.s32.totalorder %s35, %s36
      %p50 = scmp.eq.s32.totalorder %s28, 1
      %p51 = por %p49, %p50
      %p53 = scmp.ne.s32.totalorder %s36, %s52
      %p54 = scmp.eq.s32.totalorder %s28, 0
      %p55 = por %p53, %p54
      %s57 = sadd.s32 %s56, 1
      %p60 = scmp.eq.s32.totalorder %s22, 1
      %p61 = scmp.ne.s32.totalorder %s56, %s58
      %p62 = scmp.eq.s32.totalorder %s22, 0
      %p63 = por %p61, %p62
      %p64 = scmp.ne.s32.totalorder %s56, %s58
      %p65 = scmp.eq.s32.totalorder %s27, 1
      %p66 = por %p64, %p65
      %p67 = scmp.ne.s32.totalorder %s58, %s59
      %p68 = scmp.eq.s32.totalorder %s27, 0
      %p69 = por %p67, %p68
      %p70 = scmp.ne.s32.totalorder %s58, %s59
      %p71 = scmp.eq.s32.totalorder %s28, 1
      %p72 = por %p70, %p71
      %p74 = scmp.ne.s32.totalorder %s59, %s73
      %p75 = scmp.eq.s32.totalorder %s28, 0
      %p76 = por %p74, %p75
      %s78 = sadd.s32 %s77, 1
      %p81 = scmp.eq.s32.totalorder %s22, 1
      %p82 = scmp.ne.s32.totalorder %s77, %s79
      %p83 = scmp.eq.s32.totalorder %s22, 0
      %p84 = por %p82, %p83
      %p85 = scmp.ne.s32.totalorder %s77, %s79
      %p86 = scmp.eq.s32.totalorder %s27, 1
      %p87 = por %p85, %p86
      %p88 = scmp.ne.s32.totalorder %s79, %s80
      %p89 = scmp.eq.s32.totalorder %s27, 0
      %p90 = por %p88, %p89
      %p91 = scmp.ne.s32.totalorder %s79, %s80
      %p92 = scmp.eq.s32.totalorder %s28, 1
      %p93 = por %p91, %p92
      %p95 = scmp.ne.s32.totalorder %s80, %s94
      %p96 = scmp.eq.s32.totalorder %s28, 0
      %p97 = por %p95, %p96
      %s99 = sadd.s32 %s98, 1
      %p102 = scmp.eq.s32.totalorder %s22, 1
      %p103 = scmp.ne.s32.totalorder %s98, %s100
      %p104 = scmp.eq.s32.totalorder %s22, 0
      %p105 = por %p103, %p104
      %p106 = scmp.ne.s32.totalorder %s98, %s100
      %p107 = scmp.eq.s32.totalorder %s27, 1
      %p108 = por %p106, %p107
      %p109 = scmp.ne.s32.totalorder %s100, %s101
      %p110 = scmp.eq.s32.totalorder %s27, 0
      %p111 = por %p109, %p110
      %p112 = scmp.ne.s32.totalorder %s100, %s101
      %p113 = scmp.eq.s32.totalorder %s28, 1
      %p114 = por %p112, %p113
      %p116 = scmp.ne.s32.totalorder %s101, %s115
      %p117 = scmp.eq.s32.totalorder %s28, 0
      %p118 = por %p116, %p117
      %s120 = sadd.s32 %s119, 1
      %p123 = scmp.eq.s32.totalorder %s22, 1
      %p124 = scmp.ne.s32.totalorder %s119, %s121
      %p125 = scmp.eq.s32.totalorder %s22, 0
      %p126 = por %p124, %p125
      %p127 = scmp.ne.s32.totalorder %s119, %s121
      %p128 = scmp.eq.s32.totalorder %s27, 1
      %p129 = por %p127, %p128
      %p130 = scmp.ne.s32.totalorder %s121, %s122
      %p131 = scmp.eq.s32.totalorder %s27, 0
      %p132 = por %p130, %p131
      %p133 = scmp.ne.s32.totalorder %s121, %s122
      %p134 = scmp.eq.s32.totalorder %s28, 1
      %p135 = por %p133, %p134
      %p137 = scmp.ne.s32.totalorder %s122, %s136
      %p138 = scmp.eq.s32.totalorder %s28, 0
      %p139 = por %p137, %p138
      %s141 = sadd.s32 %s140, 1
      %p144 = scmp.eq.s32.totalorder %s22, 1
      %p145 = scmp.ne.s32.totalorder %s140, %s142
      %p146 = scmp.eq.s32.totalorder %s22, 0
      %p147 = por %p145, %p146
      %p148 = scmp.ne.s32.totalorder %s140, %s142
      %p149 = scmp.eq.s32.totalorder %s27, 1
      %p150 = por %p148, %p149
      %p151 = scmp.ne.s32.totalorder %s142, %s143
      %p152 = scmp.eq.s32.totalorder %s27, 0
      %p153 = por %p151, %p152
      %p154 = scmp.ne.s32.totalorder %s142, %s143
      %p155 = scmp.eq.s32.totalorder %s28, 1
      %p156 = por %p154, %p155
      %p158 = scmp.ne.s32.totalorder %s143, %s157
      %p159 = scmp.eq.s32.totalorder %s28, 0
      %p160 = por %p158, %p159
      %s162 = sadd.s32 %s161, 1
      %p165 = scmp.eq.s32.totalorder %s22, 1
      %p166 = scmp.ne.s32.totalorder %s161, %s163
      %p167 = scmp.eq.s32.totalorder %s22, 0
      %p168 = por %p166, %p167
      %p169 = scmp.ne.s32.totalorder %s161, %s163
      %p170 = scmp.eq.s32.totalorder %s27, 1
      %p171 = por %p169, %p170
      %p172 = scmp.ne.s32.totalorder %s163, %s164
      %p173 = scmp.eq.s32.totalorder %s27, 0
      %p174 = por %p172, %p173
      %p175 = scmp.ne.s32.totalorder %s163, %s164
      %p176 = scmp.eq.s32.totalorder %s28, 1
      %p177 = por %p175, %p176
      %p179 = scmp.ne.s32.totalorder %s164, %s178
      %p180 = scmp.eq.s32.totalorder %s28, 0
      %p181 = por %p179, %p180
      %s183 = sadd.s32 %s182, 1
      %p186 = scmp.eq.s32.totalorder %s22, 1
      %p187 = scmp.ne.s32.totalorder %s182, %s184
      %p188 = scmp.eq.s32.totalorder %s22, 0
      %p189 = por %p187, %p188
      %p190 = scmp.ne.s32.totalorder %s182, %s184
      %p191 = scmp.eq.s32.totalorder %s27, 1
      %p192 = por %p190, %p191
      %p193 = scmp.ne.s32.totalorder %s184, %s185
      %p194 = scmp.eq.s32.totalorder %s27, 0
      %p195 = por %p193, %p194
      %p196 = scmp.ne.s32.totalorder %s184, %s185
      %p197 = scmp.eq.s32.totalorder %s28, 1
      %p198 = por %p196, %p197
      %p200 = scmp.ne.s32.totalorder %s185, %s199
      %p201 = scmp.eq.s32.totalorder %s28, 0
      %p202 = por %p200, %p201
      %s204 = sadd.s32 %s203, 1
      %p207 = scmp.eq.s32.totalorder %s22, 1
      %p208 = scmp.ne.s32.totalorder %s203, %s205
      %p209 = scmp.eq.s32.totalorder %s22, 0
      %p210 = por %p208, %p209
      %p211 = scmp.ne.s32.totalorder %s203, %s205
      %p212 = scmp.eq.s32.totalorder %s27, 1
      %p213 = por %p211, %p212
      %p214 = scmp.ne.s32.totalorder %s205, %s206
      %p215 = scmp.eq.s32.totalorder %s27, 0
      %p216 = por %p214, %p215
      %p217 = scmp.ne.s32.totalorder %s205, %s206
      %p218 = scmp.eq.s32.totalorder %s28, 1
      %p219 = por %p217, %p218
      %p221 = scmp.ne.s32.totalorder %s206, %s220
      %p222 = scmp.eq.s32.totalorder %s28, 0
      %p223 = por %p221, %p222
      %s225 = sadd.s32 %s224, 1
      %p228 = scmp.eq.s32.totalorder %s22, 1
      %p229 = scmp.ne.s32.totalorder %s224, %s226
      %p230 = scmp.eq.s32.totalorder %s22, 0
      %p231 = por %p229, %p230
      %p232 = scmp.ne.s32.totalorder %s224, %s226
      %p233 = scmp.eq.s32.totalorder %s27, 1
      %p234 = por %p232, %p233
      %p235 = scmp.ne.s32.totalorder %s226, %s227
      %p236 = scmp.eq.s32.totalorder %s27, 0
      %p237 = por %p235, %p236
      %p238 = scmp.ne.s32.totalorder %s226, %s227
      %p239 = scmp.eq.s32.totalorder %s28, 1
      %p240 = por %p238, %p239
      %p242 = scmp.ne.s32.totalorder %s227, %s241
      %p243 = scmp.eq.s32.totalorder %s28, 0
      %p244 = por %p242, %p243
      %s246 = sadd.s32 %s245, 1
      %p249 = scmp.eq.s32.totalorder %s22, 1
      %p250 = scmp.ne.s32.totalorder %s245, %s247
      %p251 = scmp.eq.s32.totalorder %s22, 0
      %p252 = por %p250, %p251
      %p253 = scmp.ne.s32.totalorder %s245, %s247
      %p254 = scmp.eq.s32.totalorder %s27, 1
      %p255 = por %p253, %p254
      %p256 = scmp.ne.s32.totalorder %s247, %s248
      %p257 = scmp.eq.s32.totalorder %s27, 0
      %p258 = por %p256, %p257
      %p259 = scmp.ne.s32.totalorder %s247, %s248
      %p260 = scmp.eq.s32.totalorder %s28, 1
      %p261 = por %p259, %p260
      %p263 = scmp.ne.s32.totalorder %s248, %s262
      %p264 = scmp.eq.s32.totalorder %s28, 0
      %p265 = por %p263, %p264
      %s267 = sadd.s32 %s266, 1
      %p270 = scmp.eq.s32.totalorder %s22, 1
      %p271 = scmp.ne.s32.totalorder %s266, %s268
      %p272 = scmp.eq.s32.totalorder %s22, 0
      %p273 = por %p271, %p272
      %p274 = scmp.ne.s32.totalorder %s266, %s268
      %p275 = scmp.eq.s32.totalorder %s27, 1
      %p276 = por %p274, %p275
      %p277 = scmp.ne.s32.totalorder %s268, %s269
      %p278 = scmp.eq.s32.totalorder %s27, 0
      %p279 = por %p277, %p278
      %p280 = scmp.ne.s32.totalorder %s268, %s269
      %p281 = scmp.eq.s32.totalorder %s28, 1
      %p282 = por %p280, %p281
      %p284 = scmp.ne.s32.totalorder %s269, %s283
      %p285 = scmp.eq.s32.totalorder %s28, 0
      %p286 = por %p284, %p285
      %s288 = sadd.s32 %s287, 1
      %p291 = scmp.eq.s32.totalorder %s22, 1
      %p292 = scmp.ne.s32.totalorder %s287, %s289
      %p293 = scmp.eq.s32.totalorder %s22, 0
      %p294 = por %p292, %p293
      %p295 = scmp.ne.s32.totalorder %s287, %s289
      %p296 = scmp.eq.s32.totalorder %s27, 1
      %p297 = por %p295, %p296
      %p298 = scmp.ne.s32.totalorder %s289, %s290
      %p299 = scmp.eq.s32.totalorder %s27, 0
      %p300 = por %p298, %p299
      %p301 = scmp.ne.s32.totalorder %s289, %s290
      %p302 = scmp.eq.s32.totalorder %s28, 1
      %p303 = por %p301, %p302
      %p305 = scmp.ne.s32.totalorder %s290, %s304
      %p306 = scmp.eq.s32.totalorder %s28, 0
      %p307 = por %p305, %p306
      %s308 = ssub.s32 %s22, %s29
      %p309 = scmp.eq.s32.totalorder %s308, 0
      %s311 = sadd.s32 %s310, 1
      %s312 = scalar_select %p309, %s310, %s311
      %p315 = pneg %p309
      %p316 = scmp.eq.s32.totalorder %s22, 1
      %p317 = por %p315, %p316
      %p318 = scmp.ne.s32.totalorder %s310, %s313
      %p319 = scmp.eq.s32.totalorder %s22, 0
      %p320 = por %p318, %p319
      %p321 = scmp.ne.s32.totalorder %s310, %s313
      %p322 = scmp.eq.s32.totalorder %s27, 1
      %p323 = por %p321, %p322
      %p324 = scmp.ne.s32.totalorder %s313, %s314
      %p325 = scmp.eq.s32.totalorder %s27, 0
      %p326 = por %p324, %p325
      %p327 = scmp.ne.s32.totalorder %s313, %s314
      %p328 = scmp.eq.s32.totalorder %s28, 1
      %p329 = por %p327, %p328
      %p331 = scmp.ne.s32.totalorder %s314, %s330
      %p332 = scmp.eq.s32.totalorder %s28, 0
      %p333 = por %p331, %p332
      %p334 = scmp.le.s32.totalorder 1, %s22
      %p335 = scmp.lt.s32.totalorder %s22, 3
      %p336 = pnand %p334, %p335
      %p337 = pneg %p336
      // Predicated region
      $region9: #{tpu_custom_call.1} parent=5 // pred_check
        _
      $region10: #{tpu_custom_call.1} parent=5 // pred_check_branch
        %339 = sbr.rel (%p336) target = $region12
      $region11: #{tpu_custom_call.1} parent=5 // pred_region
        %s340 = ssub.s32 %s22, 1
        // Predicated region
        $region13: #{tpu_custom_call.1} parent=11 // pred_check
          %p341 = pneg %p69
        $region14: #{tpu_custom_call.1} parent=11 // pred_check_branch
          %343 = sbr.rel (%p341) target = $region16
        $region15: #{tpu_custom_call.1} parent=11 // pred_region
          _
        $region16: #{tpu_custom_call.1} parent=11 // pred_fallthru
          _
        // Predicated region
        $region17: #{tpu_custom_call.1} parent=11 // pred_check
          %p344 = pneg %p90
        $region18: #{tpu_custom_call.1} parent=11 // pred_check_branch
          %346 = sbr.rel (%p344) target = $region20
        $region19: #{tpu_custom_call.1} parent=11 // pred_region
          _
        $region20: #{tpu_custom_call.1} parent=11 // pred_fallthru
          _
        // Predicated region
        $region21: #{tpu_custom_call.1} parent=11 // pred_check
          %p347 = pneg %p111
        $region22: #{tpu_custom_call.1} parent=11 // pred_check_branch
          %349 = sbr.rel (%p347) target = $region24
        $region23: #{tpu_custom_call.1} parent=11 // pred_region
          _
        $region24: #{tpu_custom_call.1} parent=11 // pred_fallthru
          _
        // Predicated region
        $region25: #{tpu_custom_call.1} parent=11 // pred_check
          %p350 = pneg %p132
        $region26: #{tpu_custom_call.1} parent=11 // pred_check_branch
          %352 = sbr.rel (%p350) target = $region28
        $region27: #{tpu_custom_call.1} parent=11 // pred_region
          _
        $region28: #{tpu_custom_call.1} parent=11 // pred_fallthru
          _
        // Predicated region
        $region29: #{tpu_custom_call.1} parent=11 // pred_check
          %p353 = pneg %p153
        $region30: #{tpu_custom_call.1} parent=11 // pred_check_branch
          %355 = sbr.rel (%p353) target = $region32
        $region31: #{tpu_custom_call.1} parent=11 // pred_region
          _
        $region32: #{tpu_custom_call.1} parent=11 // pred_fallthru
          _
        // Predicated region
        $region33: #{tpu_custom_call.1} parent=11 // pred_check
          %p356 = pneg %p174
        $region34: #{tpu_custom_call.1} parent=11 // pred_check_branch
          %358 = sbr.rel (%p356) target = $region36
        $region35: #{tpu_custom_call.1} parent=11 // pred_region
          _
        $region36: #{tpu_custom_call.1} parent=11 // pred_fallthru
          _
        // Predicated region
        $region37: #{tpu_custom_call.1} parent=11 // pred_check
          %p359 = pneg %p195
        $region38: #{tpu_custom_call.1} parent=11 // pred_check_branch
          %361 = sbr.rel (%p359) target = $region40
        $region39: #{tpu_custom_call.1} parent=11 // pred_region
          _
        $region40: #{tpu_custom_call.1} parent=11 // pred_fallthru
          _
        // Predicated region
        $region41: #{tpu_custom_call.1} parent=11 // pred_check
          %p362 = pneg %p216
        $region42: #{tpu_custom_call.1} parent=11 // pred_check_branch
          %364 = sbr.rel (%p362) target = $region44
        $region43: #{tpu_custom_call.1} parent=11 // pred_region
          _
        $region44: #{tpu_custom_call.1} parent=11 // pred_fallthru
          _
        // Predicated region
        $region45: #{tpu_custom_call.1} parent=11 // pred_check
          %p365 = pneg %p237
        $region46: #{tpu_custom_call.1} parent=11 // pred_check_branch
          %367 = sbr.rel (%p365) target = $region48
        $region47: #{tpu_custom_call.1} parent=11 // pred_region
          _
        $region48: #{tpu_custom_call.1} parent=11 // pred_fallthru
          _
        // Predicated region
        $region49: #{tpu_custom_call.1} parent=11 // pred_check
          %p368 = pneg %p258
        $region50: #{tpu_custom_call.1} parent=11 // pred_check_branch
          %370 = sbr.rel (%p368) target = $region52
        $region51: #{tpu_custom_call.1} parent=11 // pred_region
          _
        $region52: #{tpu_custom_call.1} parent=11 // pred_fallthru
          _
        // Predicated region
        $region53: #{tpu_custom_call.1} parent=11 // pred_check
          %p371 = pneg %p279
        $region54: #{tpu_custom_call.1} parent=11 // pred_check_branch
          %373 = sbr.rel (%p371) target = $region56
        $region55: #{tpu_custom_call.1} parent=11 // pred_region
          _
        $region56: #{tpu_custom_call.1} parent=11 // pred_fallthru
          _
        // Predicated region
        $region57: #{tpu_custom_call.1} parent=11 // pred_check
          %p374 = pneg %p300
        $region58: #{tpu_custom_call.1} parent=11 // pred_check_branch
          %376 = sbr.rel (%p374) target = $region60
        $region59: #{tpu_custom_call.1} parent=11 // pred_region
          _
        $region60: #{tpu_custom_call.1} parent=11 // pred_fallthru
          _
      $region12: #{tpu_custom_call.1} parent=5 // pred_fallthru
        _
      %p377 = scmp.lt.s32.totalorder %s22, 2
      // Predicated region
      $region61: #{tpu_custom_call.1} parent=5 // pred_check
        %p378 = pneg %p377
      $region62: #{tpu_custom_call.1} parent=5 // pred_check_branch
        %380 = sbr.rel (%p378) target = $region64
      $region63: #{tpu_custom_call.1} parent=5 // pred_region
        // Predicated region
        $region65: #{tpu_custom_call.1} parent=63 // pred_check
          %p381 = pneg %p42
        $region66: #{tpu_custom_call.1} parent=63 // pred_check_branch
          %383 = sbr.rel (%p381) target = $region68
        $region67: #{tpu_custom_call.1} parent=63 // pred_region
          %p384 = scmp.lt.s32.totalorder %s22, 1
          %s385 = scalar_select %p384, %s22, 1
          %s386 = smul.addr %s385, 2
          %s387 = smul.addr %s386, 8
          %s388 = scalar_lea.vmem %s0, %s387
        $region68: #{tpu_custom_call.1} parent=63 // pred_fallthru
          _
      $region64: #{tpu_custom_call.1} parent=5 // pred_fallthru
        _
      %p389 = scmp.le.s32.totalorder 1, %s22
      %p390 = scmp.lt.s32.totalorder %s22, 3
      %p391 = pnand %p389, %p390
      %p392 = pneg %p391
      // Predicated region
      $region69: #{tpu_custom_call.1} parent=5 // pred_check
        _
      $region70: #{tpu_custom_call.1} parent=5 // pred_check_branch
        %394 = sbr.rel (%p391) target = $region72
      $region71: #{tpu_custom_call.1} parent=5 // pred_region
        %s395 = ssub.s32 %s22, 1
        %p396 = scmp.lt.s32.totalorder %s27, 1
        %s397 = scalar_select %p396, %s27, 1
        %s398 = smul.addr %s397, 2
        %s399 = smul.addr %s398, 8
        %s400 = scalar_lea.vmem %s0, %s399
        %p401 = pneg %p48
        %p402 = pneg %p45
        %p403 = pneg %p69
        %p404 = pneg %p66
        %p405 = pneg %p90
        %p406 = pneg %p87
        %p407 = pneg %p111
        %p408 = pneg %p108
        %p409 = pneg %p132
        %p410 = pneg %p129
        %p411 = pneg %p153
        %p412 = pneg %p150
        %p413 = pneg %p174
        %p414 = pneg %p171
        %p415 = pneg %p195
        %p416 = pneg %p192
        %p417 = pneg %p216
        %p418 = pneg %p213
        %p419 = pneg %p237
        %p420 = pneg %p234
        %p421 = pneg %p258
        %p422 = pneg %p255
        %p423 = pneg %p279
        %p424 = pneg %p276
        %p425 = pneg %p300
        %p426 = pneg %p297
        %p427 = pneg %p326
        %p428 = pneg %p323
        %s429 = sand.u32 %s313, 1
        %s430 = scalar_lea.sflag [#allocation3], %s429
        %s431 = sand.u32 %s313, 1
        %s432 = scalar_lea.vmem [#allocation2], %s431
        %p433 = scmp.lt.s32.totalorder %s27, 1
        %s434 = scalar_select %p433, %s27, 1
        %s435 = smul.addr %s434, 2
        %s436 = smul.addr %s435, 8
        %s437 = scalar_lea.vmem %s0, %s436
        %v439 = vld [vmem:[%s437] sm:$0xff]
        %v440 = vld [vmem:[%s437 + $0x8] sm:$0xff]
        %v441 = vld [vmem:[%s1] sm:$0xf]
        %vm444 = vcmask 1040384
        %v445 = vrot.slane %v439, 7
        %v446 = vrot.slane %v440, 7
        %v447 = vsel %vm444, %v445, %v446
        %v450 = vsel %vm444, 0.0, %v445
        %451 = vrot.lane.b32.xlu0 %v439, 4
        %v452 = vpop.permute.xlu0 %451
        %453 = vrot.lane.b32.xlu0 %v440, 4
        %v454 = vpop.permute.xlu0 %453
        %vm457 = vcmask 31744
        %v458 = vsel %vm457, %v450, %v452
        %v459 = vsel %vm457, %v447, %v454
        %v460 = vpack.c.bf16 %v459, %v458
        %v461 = vld [vmem:[%s2] sm:$0x1]
        %v463 = vperm.slane %v461, 0
        %vm465 = vcmask 64512
        %v467 = vsel %vm465, %v460, 0
        %vm469 = vcmask 1043456
        %v471 = vsel %vm469, %v441, 0
        %473 = vmatpush.bf16.msra.mxu0 0
        %474 = vmatpush.bf16.msra.mxu0 0
        %475 = vmatpush.bf16.msra.mxu0 0
        %476 = vmatpush.bf16.msra.mxu0 0
        %477 = vmatpush.bf16.msra.mxu0 0
        %478 = vmatpush.bf16.msra.mxu0 0
        %479 = vmatpush.bf16.msra.mxu0 0
        %480 = vmatpush.bf16.msra.mxu0 %v471
        %481 = vmatmul.bf16.gmra.mxu0 %v467
        %v482 = vpop.f32.mrf.mxu0
        %v483 = vadd.f32 %v463, %v482
        %v484 = vpop.f32.mrf.mxu0
        %v485 = vadd.f32 %v463, %v484
        %486 = vdwg.mxu0
        %v487 = vmax.f32 %v483, 0.0
        %v488 = vmax.f32 %v485, 0.0
        %v489 = vld [vmem:[%s3] sm:$0xf]
        %v490 = vld [vmem:[%s3 + $0x4] sm:$0xf]
        %v491 = vld [vmem:[%s3 + $0x8] sm:$0xf]
        %v492 = vld [vmem:[%s3 + $0xc] sm:$0xf]
        %v493 = vld [vmem:[%s3 + $0x10] sm:$0xf]
        %v494 = vld [vmem:[%s3 + $0x14] sm:$0xf]
        %v495 = vld [vmem:[%s3 + $0x18] sm:$0xf]
        %v496 = vld [vmem:[%s3 + $0x1c] sm:$0xf]
        %v499 = vrot.slane %v487, 7
        %v500 = vrot.slane %v488, 7
        %v501 = vsel %vm444, %v499, %v500
        %v504 = vsel %vm444, 0.0, %v499
        %505 = vrot.lane.b32.xlu0 %v487, 32
        %v506 = vpop.permute.xlu0 %505
        %507 = vrot.lane.b32.xlu0 %v488, 32
        %v508 = vpop.permute.xlu0 %507
        %vm511 = vcmask 261120
        %v512 = vsel %vm511, %v504, %v506
        %v513 = vsel %vm511, %v501, %v508
        %v514 = vpack.c.bf16 %v513, %v512
        %v515 = vld [vmem:[%s4] sm:$0x1]
        %v517 = vperm.slane %v515, 0
        %v527 = vunpack.c.l.b16 %v489
        %v528 = vunpack.c.l.b16 %v490
        %v529 = vunpack.c.l.b16 %v491
        %v530 = vunpack.c.l.b16 %v492
        %v531 = vunpack.c.l.b16 %v493
        %v532 = vunpack.c.l.b16 %v494
        %v533 = vunpack.c.l.b16 %v495
        %v534 = vunpack.c.l.b16 %v496
        %v535 = vpack.c.b16 %v528, %v527
        %v536 = vpack.c.b16 %v530, %v529
        %v537 = vpack.c.b16 %v532, %v531
        %v538 = vpack.c.b16 %v534, %v533
        %vm543 = vcmask 523264
        %v545 = vsel %vm543, %v514, 0
        %547 = vmatpush.bf16.msra.mxu0 0
        %548 = vmatpush.bf16.msra.mxu0 0
        %549 = vmatpush.bf16.msra.mxu0 0
        %550 = vmatpush.bf16.msra.mxu0 0
        %551 = vmatpush.bf16.msra.mxu0 %v538
        %552 = vmatpush.bf16.msra.mxu0 %v537
        %553 = vmatpush.bf16.msra.mxu0 %v536
        %554 = vmatpush.bf16.msra.mxu0 %v535
        %555 = vmatmul.bf16.gmra.mxu0 %v545
        %v556 = vpop.f32.mrf.mxu0
        %v557 = vadd.f32 %v517, %v556
        %v558 = vpop.f32.mrf.mxu0
        %v559 = vadd.f32 %v517, %v558
        %560 = vdwg.mxu0
        %v561 = vmax.f32 %v557, 0.0
        %v562 = vmax.f32 %v559, 0.0
        %v563 = vpack.c.bf16 %v440, %v439
        %v564 = vld [vmem:[%s5] sm:$0x3]
        %v565 = vld [vmem:[%s6] sm:$0x1]
        %v567 = vperm.slane %v565, 0
        %v570 = vsel %vm457, %v563, 0
        %vm572 = vcmask 1041408
        %v574 = vsel %vm572, %v564, 0
        %576 = vmatpush.bf16.msra.mxu0 0
        %577 = vmatpush.bf16.msra.mxu0 0
        %578 = vmatpush.bf16.msra.mxu0 0
        %579 = vmatpush.bf16.msra.mxu0 0
        %580 = vmatpush.bf16.msra.mxu0 0
        %581 = vmatpush.bf16.msra.mxu0 0
        %582 = vmatpush.bf16.msra.mxu0 0
        %583 = vmatpush.bf16.msra.mxu0 %v574
        %584 = vmatmul.bf16.gmra.mxu0 %v570
        %v585 = vpop.f32.mrf.mxu0
        %v586 = vadd.f32 %v567, %v585
        %v587 = vpop.f32.mrf.mxu0
        %v588 = vadd.f32 %v567, %v587
        %589 = vdwg.mxu0
        %v590 = vadd.f32 %v561, %v586
        %v591 = vadd.f32 %v562, %v588
        %v592 = vmax.f32 %v590, 0.0
        %v593 = vmax.f32 %v591, 0.0
        %v594 = vld [vmem:[%s7] sm:$0xf]
        %v595 = vld [vmem:[%s7 + $0x4] sm:$0xf]
        %v596 = vld [vmem:[%s7 + $0x8] sm:$0xf]
        %v597 = vld [vmem:[%s7 + $0xc] sm:$0xf]
        %v598 = vld [vmem:[%s7 + $0x10] sm:$0xf]
        %v599 = vld [vmem:[%s7 + $0x14] sm:$0xf]
        %v600 = vld [vmem:[%s7 + $0x18] sm:$0xf]
        %v601 = vld [vmem:[%s7 + $0x1c] sm:$0xf]
        %v604 = vrot.slane %v592, 6
        %v605 = vrot.slane %v593, 6
        %v606 = vsel %vm572, %v604, %v605
        %v609 = vsel %vm572, 0.0, %v604
        %610 = vrot.lane.b32.xlu0 %v592, 32
        %v611 = vpop.permute.xlu0 %610
        %612 = vrot.lane.b32.xlu0 %v593, 32
        %v613 = vpop.permute.xlu0 %612
        %v616 = vsel %vm511, %v609, %v611
        %v617 = vsel %vm511, %v606, %v613
        %v618 = vpack.c.bf16 %v617, %v616
        %v619 = vld [vmem:[%s8] sm:$0x1]
        %v621 = vperm.slane %v619, 0
        %v631 = vunpack.c.l.b16 %v594
        %v632 = vunpack.c.l.b16 %v595
        %v633 = vunpack.c.l.b16 %v596
        %v634 = vunpack.c.l.b16 %v597
        %v635 = vunpack.c.l.b16 %v598
        %v636 = vunpack.c.l.b16 %v599
        %v637 = vunpack.c.l.b16 %v600
        %v638 = vunpack.c.l.b16 %v601
        %v639 = vpack.c.b16 %v632, %v631
        %v640 = vpack.c.b16 %v634, %v633
        %v641 = vpack.c.b16 %v636, %v635
        %v642 = vpack.c.b16 %v638, %v637
        %v648 = vsel %vm543, %v618, 0
        %650 = vmatpush.bf16.msra.mxu0 0
        %651 = vmatpush.bf16.msra.mxu0 0
        %652 = vmatpush.bf16.msra.mxu0 0
        %653 = vmatpush.bf16.msra.mxu0 0
        %654 = vmatpush.bf16.msra.mxu0 %v642
        %655 = vmatpush.bf16.msra.mxu0 %v641
        %656 = vmatpush.bf16.msra.mxu0 %v640
        %657 = vmatpush.bf16.msra.mxu0 %v639
        %658 = vmatmul.bf16.gmra.mxu0 %v648
        %v659 = vpop.f32.mrf.mxu0
        %v660 = vadd.f32 %v621, %v659
        %v661 = vpop.f32.mrf.mxu0
        %v662 = vadd.f32 %v621, %v661
        %663 = vdwg.mxu0
        %v664 = vmax.f32 %v660, 0.0
        %v665 = vmax.f32 %v662, 0.0
        %v666 = vld [vmem:[%s9] sm:$0xf]
        %v667 = vld [vmem:[%s9 + $0x4] sm:$0xf]
        %v668 = vld [vmem:[%s9 + $0x8] sm:$0xf]
        %v669 = vld [vmem:[%s9 + $0xc] sm:$0xf]
        %v670 = vld [vmem:[%s9 + $0x10] sm:$0xf]
        %v671 = vld [vmem:[%s9 + $0x14] sm:$0xf]
        %v672 = vld [vmem:[%s9 + $0x18] sm:$0xf]
        %v673 = vld [vmem:[%s9 + $0x1c] sm:$0xf]
        %v676 = vrot.slane %v664, 6
        %v677 = vrot.slane %v665, 6
        %v678 = vsel %vm572, %v676, %v677
        %v681 = vsel %vm572, 0.0, %v676
        %682 = vrot.lane.b32.xlu0 %v664, 32
        %v683 = vpop.permute.xlu0 %682
        %684 = vrot.lane.b32.xlu0 %v665, 32
        %v685 = vpop.permute.xlu0 %684
        %v688 = vsel %vm511, %v681, %v683
        %v689 = vsel %vm511, %v678, %v685
        %v690 = vpack.c.bf16 %v689, %v688
        %v691 = vld [vmem:[%s10] sm:$0x1]
        %v693 = vperm.slane %v691, 0
        %v703 = vunpack.c.l.b16 %v666
        %v704 = vunpack.c.l.b16 %v667
        %v705 = vunpack.c.l.b16 %v668
        %v706 = vunpack.c.l.b16 %v669
        %v707 = vunpack.c.l.b16 %v670
        %v708 = vunpack.c.l.b16 %v671
        %v709 = vunpack.c.l.b16 %v672
        %v710 = vunpack.c.l.b16 %v673
        %v711 = vpack.c.b16 %v704, %v703
        %v712 = vpack.c.b16 %v706, %v705
        %v713 = vpack.c.b16 %v708, %v707
        %v714 = vpack.c.b16 %v710, %v709
        %v720 = vsel %vm543, %v690, 0
        %722 = vmatpush.bf16.msra.mxu0 0
        %723 = vmatpush.bf16.msra.mxu0 0
        %724 = vmatpush.bf16.msra.mxu0 0
        %725 = vmatpush.bf16.msra.mxu0 0
        %726 = vmatpush.bf16.msra.mxu0 %v714
        %727 = vmatpush.bf16.msra.mxu0 %v713
        %728 = vmatpush.bf16.msra.mxu0 %v712
        %729 = vmatpush.bf16.msra.mxu0 %v711
        %730 = vmatmul.bf16.gmra.mxu0 %v720
        %v731 = vpop.f32.mrf.mxu0
        %v732 = vpop.f32.mrf.mxu0
        %v733 = vadd.f32 %v693, %v732
        %734 = vdwg.mxu0
        %v735 = vmax.f32 %v733, 0.0
        %v736 = vadd.f32 %v735, %v593
        %v737 = vmax.f32 %v736, 0.0
        %v738 = vpack.c.bf16 %v737, %v737
        %v739 = vld [vmem:[%s11] sm:$0xf]
        %v740 = vld [vmem:[%s11 + $0x4] sm:$0xf]
        %v741 = vld [vmem:[%s11 + $0x8] sm:$0xf]
        %v742 = vld [vmem:[%s11 + $0xc] sm:$0xf]
        %v743 = vld [vmem:[%s12] sm:$0x1]
        %v745 = vshrl.u32 %v738, 16
        %v747 = vrot.slane %v745, 3
        %v752 = vunpack.c.l.b16 %v739
        %v753 = vunpack.c.l.b16 %v740
        %v754 = vunpack.c.l.b16 %v741
        %v755 = vunpack.c.l.b16 %v742
        %v756 = vpack.c.b16 %v753, %v752
        %v757 = vpack.c.b16 %v755, %v754
        %v761 = vsel %vm511, %v747, 0
        %763 = vmatpush.bf16.msra.mxu0 0
        %764 = vmatpush.bf16.msra.mxu0 0
        %765 = vmatpush.bf16.msra.mxu0 0
        %766 = vmatpush.bf16.msra.mxu0 0
        %767 = vmatpush.bf16.msra.mxu0 0
        %768 = vmatpush.bf16.msra.mxu0 0
        %769 = vmatpush.bf16.msra.mxu0 %v757
        %770 = vmatpush.bf16.msra.mxu0 %v756
        %771 = vmatmul.bf16.gmra.mxu0 %v761
        %v772 = vpop.f32.mrf.mxu0
        %v773 = vadd.f32 %v743, %v772
        %v774 = vpop.f32.mrf.mxu0
        %775 = vdwg.mxu0
        %vm776 = vcmask 57344
        %777 = vst.msk [vmem:[%s432] sm:$0x1] %vm776, %v773
        %s778 = sand.u32 %s313, 1
        %s779 = scalar_lea.sflag [#allocation3], %s778
        %s780 = sand.u32 %s313, 1
        %s781 = scalar_lea.vmem [#allocation2], %s780
        // Predicated region
        $region73: #{tpu_custom_call.1} parent=71 // pred_check
          %p782 = pneg %p323
        $region74: #{tpu_custom_call.1} parent=71 // pred_check_branch
          %784 = sbr.rel (%p782) target = $region76
        $region75: #{tpu_custom_call.1} parent=71 // pred_region
          %786 = vsyncadd %s779, 0
          %s787 = scalar_lea.hbm %s13, %s27
          %s789 = sshll.u32 %s781, 4
          %s790 = int_to_ptr.vmem [resolvable:$true] %s789
          %s791 = sshll.u32 %s787, 4
          %s792 = int_to_ptr.hbm [resolvable:$true] %s791
          %794 = dma.vmem_to_hbm [thread:$0]  %s790, 16, %s792, %s779
        $region76: #{tpu_custom_call.1} parent=71 // pred_fallthru
          _
      $region72: #{tpu_custom_call.1} parent=5 // pred_fallthru
        _
      %p795 = scmp.le.s32.totalorder 2, %s22
      // Predicated region
      $region77: #{tpu_custom_call.1} parent=5 // pred_check
        %p796 = pneg %p795
      $region78: #{tpu_custom_call.1} parent=5 // pred_check_branch
        %798 = sbr.rel (%p796) target = $region80
      $region79: #{tpu_custom_call.1} parent=5 // pred_region
        %s799 = ssub.s32 %s22, 2
        // Predicated region
        $region81: #{tpu_custom_call.1} parent=79 // pred_check
          %p800 = pneg %p329
        $region82: #{tpu_custom_call.1} parent=79 // pred_check_branch
          %802 = sbr.rel (%p800) target = $region84
        $region83: #{tpu_custom_call.1} parent=79 // pred_region
          %s803 = sand.u32 %s314, 1
          %s804 = scalar_lea.sflag [#allocation3], %s803
          %s805 = sand.u32 %s314, 1
          %s806 = scalar_lea.vmem [#allocation2], %s805
          %808 = dma.done %s804, 16
        $region84: #{tpu_custom_call.1} parent=79 // pred_fallthru
          _
      $region80: #{tpu_custom_call.1} parent=5 // pred_fallthru
        _
    $region6: #{tpu_custom_call.1} parent=1 // loop_footer
      %s26 = sadd.s32 1, %s22
    $region7: #{tpu_custom_call.1} parent=1 // loop_footer_branch
      %21 = sbr.rel target = $region3
    $region8: #{tpu_custom_call.1} parent=1 // loop_exit
      _
    %809 = vsyncpa [#allocation3], 1
    %s810 = scalar_lea.sflag [#allocation3], 1
    %811 = vsyncpa %s810, 1

</llo_original>
